<compile_context>
chip_gen: v6e
topology: v6e:2x2x1
jax: 0.10.0
libtpu: 0.0.40
codegen_flags: <defaults>
</compile_context>

<pallas_src>
import numpy as np
import jax
import jax.numpy as jnp
from jax.experimental import pallas as pl
from jax.experimental.pallas import tpu as pltpu


def gaussian_weights(k_size: int, sigma: float) -> np.ndarray:
    """Exactly replicates Communication.init_gaussian_filter (2-D weights)."""
    center = k_size // 2
    x, y = np.mgrid[0 - center:k_size - center, 0 - center:k_size - center]
    w = 1.0 / (2.0 * np.pi * sigma) * np.exp(
        -(np.square(x) + np.square(y)) / (2.0 * np.square(sigma)))
    return w.astype(np.float32)


def separable_taps(k_size: int, sigma: float):
    """1-D taps so that w2d[di+pad, dj+pad] == gh[di+pad] * gw[dj+pad]."""
    pad = (k_size - 1) // 2
    off = np.arange(-pad, pad + 1).astype(np.float64)
    g = np.exp(-np.square(off) / (2.0 * sigma * sigma))
    amp = 1.0 / (2.0 * np.pi * sigma)
    gw = [float(v) for v in g]            # W-direction taps
    gh = [float(amp * v) for v in g]      # H-direction taps (amplitude folded)
    return gh, gw, pad


def make_comm_kernel(C, H, W, k_size, c_sigma, threshold):
    gh, gw, pad = separable_taps(k_size, c_sigma)
    thr = float(threshold)

    def sep_conv_1d(x, taps, axis, size):
        """Zero-padded "same" 1-D convolution along `axis` of a (H, W) array.

        Shift-and-add: pltpu.roll on the XLU + weighted adds on the VPU, with
        out-of-range (zero-pad) positions masked via a broadcasted iota.
        np.roll semantics: roll(x, s)[j] = x[(j - s) mod size].
        """
        idx = jax.lax.broadcasted_iota(jnp.int32, x.shape, axis)
        acc = taps[pad] * x
        for d in range(1, pad + 1):
            # +d term: y[j] = x[j + d], valid while j < size - d
            xp = pltpu.roll(x, shift=(size - d) % size, axis=axis)
            acc = acc + taps[pad + d] * jnp.where(idx < size - d, xp, 0.0)
            # -d term: y[j] = x[j - d], valid while j >= d
            xm = pltpu.roll(x, shift=d, axis=axis)
            acc = acc + taps[pad - d] * jnp.where(idx >= d, xm, 0.0)
        return acc

    def kernel(conf_ref, warp_ref, mask_ref, sums_ref):
        # conf_ref: (1, 1, C, H, W)  confidence maps for one (batch, agent)
        # warp_ref: (1, 1, H, W)     warp mask (zeros mark padded areas)
        # mask_ref: (1, 1, H, W)     output communication mask
        # sums_ref: (1, 1, 1, 1)     per-agent mask sum (rate partial sum)
        l = pl.program_id(1)

        @pl.when(l == 0)
        def _():
            # ego agent always transmits everything; excluded from the rate.
            mask_ref[0, 0] = jnp.ones((H, W), jnp.float32)
            sums_ref[0, 0] = jnp.zeros((1, 1), jnp.float32)

        @pl.when(l > 0)
        def _():
            # max over channels first (sigmoid is monotonic) -> C x fewer exps
            m = jnp.max(conf_ref[0, 0], axis=0)                    # (H, W)
            cm = jax.nn.sigmoid(m) * warp_ref[0, 0]                # (H, W)
            # separable "same" gaussian smoothing: W direction then H direction
            t = sep_conv_1d(cm, gw, axis=1, size=W)
            a = sep_conv_1d(t, gh, axis=0, size=H)
            msk = jnp.where(a > thr, 1.0, 0.0).astype(jnp.float32)
            mask_ref[0, 0] = msk
            sums_ref[0, 0] = jnp.sum(msk, keepdims=True)

    return kernel


def communication_forward(conf, warp, *, k_size=5, c_sigma=1.0, threshold=0.01):
    """
    conf: (B, L, C, H, W) float32 confidence maps (L agents per sample)
    warp: (B, 1, H, W)    float32 warp masks
    Returns (communication_masks (B*L, 1, H, W), communication_rate scalar).
    """
    B, L, C, H, W = conf.shape
    kernel = make_comm_kernel(C, H, W, k_size, c_sigma, threshold)

    masks, sums = pl.pallas_call(
        kernel,
        out_shape=(
            jax.ShapeDtypeStruct((B, L, H, W), jnp.float32),
            jax.ShapeDtypeStruct((B, L, 1, 1), jnp.float32),
        ),
        grid=(B, L),
        in_specs=[
            pl.BlockSpec((1, 1, C, H, W), lambda b, l: (b, l, 0, 0, 0)),
            pl.BlockSpec((1, 1, H, W), lambda b, l: (b, 0, 0, 0)),
        ],
        out_specs=(
            pl.BlockSpec((1, 1, H, W), lambda b, l: (b, l, 0, 0)),
            pl.BlockSpec((1, 1, 1, 1), lambda b, l: (b, l, 0, 0)),
        ),
        compiler_params=pltpu.CompilerParams(
            dimension_semantics=("parallel", "parallel")),
    )(conf, warp)

    # Rate uses agents 1..L-1; the l==0 partial sum is stored as 0 in-kernel,
    # so summing over all agents is equivalent.  Only (B, L) scalars touched.
    if L > 1:
        per_sample = jnp.sum(sums[:, :, 0, 0], axis=1) / ((L - 1) * H * W)
        rate = jnp.mean(per_sample)
    else:
        rate = jnp.float32(0.0)

    comm_masks = masks.reshape(B * L, 1, H, W)
    return comm_masks, rate


def reference_forward(conf, warp, *, k_size=5, c_sigma=1.0, threshold=0.01):
    """Plain-JAX reference mirroring the PyTorch module (eval, threshold)."""
    B, L, C, H, W = conf.shape
    weights = jnp.asarray(gaussian_weights(k_size, c_sigma))
    pad = (k_size - 1) // 2
    sig = jax.nn.sigmoid(conf)
    mm = jnp.max(sig, axis=2) * warp                       # (B, L, H, W)
    mmp = jnp.pad(mm, ((0, 0), (0, 0), (pad, pad), (pad, pad)))
    acc = jnp.zeros((B, L, H, W), jnp.float32)
    for di in range(k_size):
        for dj in range(k_size):
            acc = acc + weights[di, dj] * mmp[:, :, di:di + H, dj:dj + W]
    mask = (acc > threshold).astype(jnp.float32)
    if L > 1:
        rates = jnp.sum(mask[:, 1:], axis=(1, 2, 3)) / ((L - 1) * H * W)
        rate = jnp.mean(rates)
    else:
        rate = jnp.float32(0.0)
    mask = mask.at[:, 0].set(1.0)
    return mask.reshape(B * L, 1, H, W), rate, acc


if __name__ == "__main__":
    B, L, C, H, W = 2, 3, 4, 16, 16
    key = jax.random.PRNGKey(0)
    k1, _ = jax.random.split(key)
    conf = jax.random.normal(k1, (B, L, C, H, W), dtype=jnp.float32)
    # warp mask: 1s with a zeroed border strip (mimics padded warp regions)
    warp = jnp.ones((B, 1, H, W), dtype=jnp.float32)
    warp = warp.at[:, :, :, -3:].set(0.0)

    thr = 0.05
    masks, rate = communication_forward(conf, warp,
                                        k_size=5, c_sigma=1.0, threshold=thr)
    jax.block_until_ready(masks)
    jax.block_until_ready(rate)

    ref_masks, ref_rate, ref_smooth = reference_forward(
        conf, warp, k_size=5, c_sigma=1.0, threshold=thr)

    m = np.asarray(masks)
    rm = np.asarray(ref_masks)
    smooth = np.asarray(ref_smooth).reshape(B * L, 1, H, W)
    # Guard against hard-threshold flips from f32 reassociation: only compare
    # pixels whose smoothed value is clearly away from the threshold.
    safe = np.abs(smooth - thr) > 1e-5
    assert np.array_equal(m[safe], rm[safe]), "mask mismatch away from threshold"
    n_unsafe = int((~safe).reshape(B, L, H, W)[:, 1:].sum())
    rate_tol = 1e-5 + n_unsafe / float(max((L - 1) * H * W, 1))
    assert abs(float(rate) - float(ref_rate)) <= rate_tol, "rate mismatch"

    print("KERNEL_OK")
</pallas_src>

<mosaic_0001>
module attributes {stable_mosaic.version = 11 : i64} {
  func.func @kernel(%arg0: i32, %arg1: i32, %arg2: memref<1x1x4x16x16xf32, #tpu.memory_space<vmem>>, %arg3: memref<1x1x16x16xf32, #tpu.memory_space<vmem>>, %arg4: memref<1x1x16x16xf32, #tpu.memory_space<vmem>>, %arg5: memref<1x1x1x1xf32, #tpu.memory_space<vmem>>) attributes {dimension_semantics = [#tpu.dimension_semantics<parallel>, #tpu.dimension_semantics<parallel>], iteration_bounds = array<i64: 2, 3>, scalar_prefetch = 0 : i64, scratch_operands = 0 : i64, tpu.core_type = #tpu.core_type<tc>, window_params = [{transform_indices = @transform_0, window_bounds = array<i64: 1, 1, 4, 16, 16>}, {transform_indices = @transform_1, window_bounds = array<i64: 1, 1, 16, 16>}, {transform_indices = @transform_2, window_bounds = array<i64: 1, 1, 16, 16>}, {transform_indices = @transform_3, window_bounds = array<i64: 1, 1, 1, 1>}]} {
    %c0_i32 = arith.constant 0 : i32
    %0 = arith.cmpi eq, %arg1, %c0_i32 : i32
    %1 = arith.extui %0 : i1 to i32
    %c0_i32_0 = arith.constant 0 : i32
    %2 = arith.cmpi ne, %1, %c0_i32_0 : i32
    scf.if %2 {
      %cst = arith.constant 1.000000e+00 : f32
      %6 = vector.broadcast %cst : f32 to vector<16x16xf32>
      %c0 = arith.constant 0 : index
      %c0_3 = arith.constant 0 : index
      %c0_4 = arith.constant 0 : index
      %c0_5 = arith.constant 0 : index
      %7 = vector.load %arg4[%c0, %c0_3, %c0_4, %c0_5] : memref<1x1x16x16xf32, #tpu.memory_space<vmem>>, vector<1x1x16x16xf32>
      %8 = vector.shape_cast %7 : vector<1x1x16x16xf32> to vector<16x16xf32>
      %9 = vector.shape_cast %6 : vector<16x16xf32> to vector<1x1x16x16xf32>
      tpu.vector_store %arg4[%c0, %c0_3, %c0_4, %c0_5], %9 {strides = array<i32>} : memref<1x1x16x16xf32, #tpu.memory_space<vmem>>, vector<1x1x16x16xf32>,
      %cst_6 = arith.constant 0.000000e+00 : f32
      %10 = vector.broadcast %cst_6 : f32 to vector<1x1xf32>
      %c0_7 = arith.constant 0 : index
      %c0_8 = arith.constant 0 : index
      %c0_9 = arith.constant 0 : index
      %c0_10 = arith.constant 0 : index
      %11 = vector.load %arg5[%c0_7, %c0_8, %c0_9, %c0_10] : memref<1x1x1x1xf32, #tpu.memory_space<vmem>>, vector<1x1x1x1xf32>
      %12 = vector.shape_cast %11 : vector<1x1x1x1xf32> to vector<1x1xf32>
      %13 = vector.shape_cast %10 : vector<1x1xf32> to vector<1x1x1x1xf32>
      tpu.vector_store %arg5[%c0_7, %c0_8, %c0_9, %c0_10], %13 {strides = array<i32>} : memref<1x1x1x1xf32, #tpu.memory_space<vmem>>, vector<1x1x1x1xf32>,
    } else {
    }
    %c0_i32_1 = arith.constant 0 : i32
    %3 = arith.cmpi sgt, %arg1, %c0_i32_1 : i32
    %4 = arith.extui %3 : i1 to i32
    %c0_i32_2 = arith.constant 0 : i32
    %5 = arith.cmpi ne, %4, %c0_i32_2 : i32
    scf.if %5 {
      %c0 = arith.constant 0 : index
      %c0_3 = arith.constant 0 : index
      %c0_4 = arith.constant 0 : index
      %c0_5 = arith.constant 0 : index
      %c0_6 = arith.constant 0 : index
      %6 = vector.load %arg2[%c0, %c0_3, %c0_4, %c0_5, %c0_6] : memref<1x1x4x16x16xf32, #tpu.memory_space<vmem>>, vector<1x1x4x16x16xf32>
      %7 = vector.shape_cast %6 : vector<1x1x4x16x16xf32> to vector<4x16x16xf32>
      %cst = arith.constant dense<0xFF800000> : vector<16x16xf32>
      %8 = vector.multi_reduction <maximumf>, %7, %cst [0] : vector<4x16x16xf32> to vector<16x16xf32>
      %9 = arith.negf %8 : vector<16x16xf32>
      %10 = math.exp %9 : vector<16x16xf32>
      %cst_7 = arith.constant 1.000000e+00 : f32
      %11 = vector.broadcast %cst_7 : f32 to vector<16x16xf32>
      %12 = arith.addf %11, %10 : vector<16x16xf32>
      %13 = arith.divf %11, %12 : vector<16x16xf32>
      %c0_8 = arith.constant 0 : index
      %c0_9 = arith.constant 0 : index
      %c0_10 = arith.constant 0 : index
      %c0_11 = arith.constant 0 : index
      %14 = vector.load %arg3[%c0_8, %c0_9, %c0_10, %c0_11] : memref<1x1x16x16xf32, #tpu.memory_space<vmem>>, vector<1x1x16x16xf32>
      %15 = vector.shape_cast %14 : vector<1x1x16x16xf32> to vector<16x16xf32>
      %16 = arith.mulf %13, %15 : vector<16x16xf32>
      %17 = tpu.iota {dimensions = array<i32: 1>} : vector<16x16xi32>
      %cst_12 = arith.constant 1.000000e+00 : f32
      %18 = vector.broadcast %cst_12 : f32 to vector<16x16xf32>
      %19 = arith.mulf %18, %16 : vector<16x16xf32>
      %c15_i32 = arith.constant 15 : i32
      %20 = tpu.dynamic_rotate %16 by %c15_i32 dim 1 : vector<16x16xf32>, i32 -> vector<16x16xf32>
      %c15_i32_13 = arith.constant 15 : i32
      %21 = vector.broadcast %c15_i32_13 : i32 to vector<16x16xi32>
      %22 = arith.cmpi slt, %17, %21 : vector<16x16xi32>
      %cst_14 = arith.constant 0.000000e+00 : f32
      %23 = vector.broadcast %cst_14 : f32 to vector<16x16xf32>
      %24 = arith.select %22, %20, %23 : vector<16x16xi1>, vector<16x16xf32>
      %cst_15 = arith.constant 0.606530666 : f32
      %25 = vector.broadcast %cst_15 : f32 to vector<16x16xf32>
      %26 = arith.mulf %25, %24 : vector<16x16xf32>
      %27 = arith.addf %19, %26 : vector<16x16xf32>
      %c1_i32 = arith.constant 1 : i32
      %28 = tpu.dynamic_rotate %16 by %c1_i32 dim 1 : vector<16x16xf32>, i32 -> vector<16x16xf32>
      %c1_i32_16 = arith.constant 1 : i32
      %29 = vector.broadcast %c1_i32_16 : i32 to vector<16x16xi32>
      %30 = arith.cmpi sge, %17, %29 : vector<16x16xi32>
      %cst_17 = arith.constant 0.000000e+00 : f32
      %31 = vector.broadcast %cst_17 : f32 to vector<16x16xf32>
      %32 = arith.select %30, %28, %31 : vector<16x16xi1>, vector<16x16xf32>
      %cst_18 = arith.constant 0.606530666 : f32
      %33 = vector.broadcast %cst_18 : f32 to vector<16x16xf32>
      %34 = arith.mulf %33, %32 : vector<16x16xf32>
      %35 = arith.addf %27, %34 : vector<16x16xf32>
      %c14_i32 = arith.constant 14 : i32
      %36 = tpu.dynamic_rotate %16 by %c14_i32 dim 1 : vector<16x16xf32>, i32 -> vector<16x16xf32>
      %c14_i32_19 = arith.constant 14 : i32
      %37 = vector.broadcast %c14_i32_19 : i32 to vector<16x16xi32>
      %38 = arith.cmpi slt, %17, %37 : vector<16x16xi32>
      %cst_20 = arith.constant 0.000000e+00 : f32
      %39 = vector.broadcast %cst_20 : f32 to vector<16x16xf32>
      %40 = arith.select %38, %36, %39 : vector<16x16xi1>, vector<16x16xf32>
      %cst_21 = arith.constant 0.135335281 : f32
      %41 = vector.broadcast %cst_21 : f32 to vector<16x16xf32>
      %42 = arith.mulf %41, %40 : vector<16x16xf32>
      %43 = arith.addf %35, %42 : vector<16x16xf32>
      %c2_i32 = arith.constant 2 : i32
      %44 = tpu.dynamic_rotate %16 by %c2_i32 dim 1 : vector<16x16xf32>, i32 -> vector<16x16xf32>
      %c2_i32_22 = arith.constant 2 : i32
      %45 = vector.broadcast %c2_i32_22 : i32 to vector<16x16xi32>
      %46 = arith.cmpi sge, %17, %45 : vector<16x16xi32>
      %cst_23 = arith.constant 0.000000e+00 : f32
      %47 = vector.broadcast %cst_23 : f32 to vector<16x16xf32>
      %48 = arith.select %46, %44, %47 : vector<16x16xi1>, vector<16x16xf32>
      %cst_24 = arith.constant 0.135335281 : f32
      %49 = vector.broadcast %cst_24 : f32 to vector<16x16xf32>
      %50 = arith.mulf %49, %48 : vector<16x16xf32>
      %51 = arith.addf %43, %50 : vector<16x16xf32>
      %52 = tpu.iota {dimensions = array<i32: 0>} : vector<16x16xi32>
      %cst_25 = arith.constant 0.159154937 : f32
      %53 = vector.broadcast %cst_25 : f32 to vector<16x16xf32>
      %54 = arith.mulf %53, %51 : vector<16x16xf32>
      %c15_i32_26 = arith.constant 15 : i32
      %55 = tpu.dynamic_rotate %51 by %c15_i32_26 dim 0 : vector<16x16xf32>, i32 -> vector<16x16xf32>
      %c15_i32_27 = arith.constant 15 : i32
      %56 = vector.broadcast %c15_i32_27 : i32 to vector<16x16xi32>
      %57 = arith.cmpi slt, %52, %56 : vector<16x16xi32>
      %cst_28 = arith.constant 0.000000e+00 : f32
      %58 = vector.broadcast %cst_28 : f32 to vector<16x16xf32>
      %59 = arith.select %57, %55, %58 : vector<16x16xi1>, vector<16x16xf32>
      %cst_29 = arith.constant 0.0965323522 : f32
      %60 = vector.broadcast %cst_29 : f32 to vector<16x16xf32>
      %61 = arith.mulf %60, %59 : vector<16x16xf32>
      %62 = arith.addf %54, %61 : vector<16x16xf32>
      %c1_i32_30 = arith.constant 1 : i32
      %63 = tpu.dynamic_rotate %51 by %c1_i32_30 dim 0 : vector<16x16xf32>, i32 -> vector<16x16xf32>
      %c1_i32_31 = arith.constant 1 : i32
      %64 = vector.broadcast %c1_i32_31 : i32 to vector<16x16xi32>
      %65 = arith.cmpi sge, %52, %64 : vector<16x16xi32>
      %cst_32 = arith.constant 0.000000e+00 : f32
      %66 = vector.broadcast %cst_32 : f32 to vector<16x16xf32>
      %67 = arith.select %65, %63, %66 : vector<16x16xi1>, vector<16x16xf32>
      %cst_33 = arith.constant 0.0965323522 : f32
      %68 = vector.broadcast %cst_33 : f32 to vector<16x16xf32>
      %69 = arith.mulf %68, %67 : vector<16x16xf32>
      %70 = arith.addf %62, %69 : vector<16x16xf32>
      %c14_i32_34 = arith.constant 14 : i32
      %71 = tpu.dynamic_rotate %51 by %c14_i32_34 dim 0 : vector<16x16xf32>, i32 -> vector<16x16xf32>
      %c14_i32_35 = arith.constant 14 : i32
      %72 = vector.broadcast %c14_i32_35 : i32 to vector<16x16xi32>
      %73 = arith.cmpi slt, %52, %72 : vector<16x16xi32>
      %cst_36 = arith.constant 0.000000e+00 : f32
      %74 = vector.broadcast %cst_36 : f32 to vector<16x16xf32>
      %75 = arith.select %73, %71, %74 : vector<16x16xi1>, vector<16x16xf32>
      %cst_37 = arith.constant 0.0215392802 : f32
      %76 = vector.broadcast %cst_37 : f32 to vector<16x16xf32>
      %77 = arith.mulf %76, %75 : vector<16x16xf32>
      %78 = arith.addf %70, %77 : vector<16x16xf32>
      %c2_i32_38 = arith.constant 2 : i32
      %79 = tpu.dynamic_rotate %51 by %c2_i32_38 dim 0 : vector<16x16xf32>, i32 -> vector<16x16xf32>
      %c2_i32_39 = arith.constant 2 : i32
      %80 = vector.broadcast %c2_i32_39 : i32 to vector<16x16xi32>
      %81 = arith.cmpi sge, %52, %80 : vector<16x16xi32>
      %cst_40 = arith.constant 0.000000e+00 : f32
      %82 = vector.broadcast %cst_40 : f32 to vector<16x16xf32>
      %83 = arith.select %81, %79, %82 : vector<16x16xi1>, vector<16x16xf32>
      %cst_41 = arith.constant 0.0215392802 : f32
      %84 = vector.broadcast %cst_41 : f32 to vector<16x16xf32>
      %85 = arith.mulf %84, %83 : vector<16x16xf32>
      %86 = arith.addf %78, %85 : vector<16x16xf32>
      %cst_42 = arith.constant 5.000000e-02 : f32
      %87 = vector.broadcast %cst_42 : f32 to vector<16x16xf32>
      %88 = arith.cmpf ogt, %86, %87 : vector<16x16xf32>
      %cst_43 = arith.constant 1.000000e+00 : f32
      %cst_44 = arith.constant 0.000000e+00 : f32
      %89 = vector.broadcast %cst_43 : f32 to vector<16x16xf32>
      %90 = vector.broadcast %cst_44 : f32 to vector<16x16xf32>
      %91 = arith.select %88, %89, %90 : vector<16x16xi1>, vector<16x16xf32>
      %c0_45 = arith.constant 0 : index
      %c0_46 = arith.constant 0 : index
      %c0_47 = arith.constant 0 : index
      %c0_48 = arith.constant 0 : index
      %92 = vector.load %arg4[%c0_45, %c0_46, %c0_47, %c0_48] : memref<1x1x16x16xf32, #tpu.memory_space<vmem>>, vector<1x1x16x16xf32>
      %93 = vector.shape_cast %92 : vector<1x1x16x16xf32> to vector<16x16xf32>
      %94 = vector.shape_cast %91 : vector<16x16xf32> to vector<1x1x16x16xf32>
      tpu.vector_store %arg4[%c0_45, %c0_46, %c0_47, %c0_48], %94 {strides = array<i32>} : memref<1x1x16x16xf32, #tpu.memory_space<vmem>>, vector<1x1x16x16xf32>,
      %95 = vector.shape_cast %91 : vector<16x16xf32> to vector<1x16x16xf32>
      %cst_49 = arith.constant dense<0.000000e+00> : vector<1xf32>
      %96 = vector.multi_reduction <add>, %95, %cst_49 [1, 2] : vector<1x16x16xf32> to vector<1xf32>
      %97 = vector.shape_cast %96 : vector<1xf32> to vector<1x1x1xf32>
      %98 = vector.extract %97[0, 0, 0] : f32 from vector<1x1x1xf32>
      %99 = vector.broadcast %98 : f32 to vector<1x1xf32>
      %c0_50 = arith.constant 0 : index
      %c0_51 = arith.constant 0 : index
      %c0_52 = arith.constant 0 : index
      %c0_53 = arith.constant 0 : index
      %100 = vector.load %arg5[%c0_50, %c0_51, %c0_52, %c0_53] : memref<1x1x1x1xf32, #tpu.memory_space<vmem>>, vector<1x1x1x1xf32>
      %101 = vector.shape_cast %100 : vector<1x1x1x1xf32> to vector<1x1xf32>
      %102 = vector.shape_cast %99 : vector<1x1xf32> to vector<1x1x1x1xf32>
      tpu.vector_store %arg5[%c0_50, %c0_51, %c0_52, %c0_53], %102 {strides = array<i32>} : memref<1x1x1x1xf32, #tpu.memory_space<vmem>>, vector<1x1x1x1xf32>,
    } else {
    }
    return
  }
  func.func @transform_0(%arg0: i32, %arg1: i32) -> (i32, i32, i32, i32, i32) {
    %c0_i32 = arith.constant 0 : i32
    %c0_i32_0 = arith.constant 0 : i32
    %c0_i32_1 = arith.constant 0 : i32
    %c0_i32_2 = arith.constant 0 : i32
    return %arg0, %arg1, %c0_i32, %c0_i32_0, %c0_i32_1 : i32, i32, i32, i32, i32
  }
  func.func @transform_1(%arg0: i32, %arg1: i32) -> (i32, i32, i32, i32) {
    %c0_i32 = arith.constant 0 : i32
    %c0_i32_0 = arith.constant 0 : i32
    %c0_i32_1 = arith.constant 0 : i32
    %c0_i32_2 = arith.constant 0 : i32
    return %arg0, %c0_i32, %c0_i32_0, %c0_i32_1 : i32, i32, i32, i32
  }
  func.func @transform_2(%arg0: i32, %arg1: i32) -> (i32, i32, i32, i32) {
    %c0_i32 = arith.constant 0 : i32
    %c0_i32_0 = arith.constant 0 : i32
    %c0_i32_1 = arith.constant 0 : i32
    return %arg0, %arg1, %c0_i32, %c0_i32_0 : i32, i32, i32, i32
  }
  func.func @transform_3(%arg0: i32, %arg1: i32) -> (i32, i32, i32, i32) {
    %c0_i32 = arith.constant 0 : i32
    %c0_i32_0 = arith.constant 0 : i32
    %c0_i32_1 = arith.constant 0 : i32
    return %arg0, %arg1, %c0_i32, %c0_i32_0 : i32, i32, i32, i32
  }
}

</mosaic_0001>

<llo_original>
// kernel: tpu_custom_call.1
$region0: #{tpu_custom_call.1}
  #allocation0 [shape = 'u32[]', space=smem, size = 0x4, offset = 0x4, fixed_abs, tag = 'smem constant byte address 0x4 - core index']
  #allocation1 [shape = 'u32[144,128]{1,0:T(1,128)}', space=vmem, size = 0x12000, scoped, tag = 'internal scratch']
  %s0 = inlined_call_operand.hbm [shape: f32[2,3,4,16,16], index: 0, kind: input, shape index: {}]
  %s1 = inlined_call_operand.hbm [shape: f32[2,1,16,16], index: 1, kind: input, shape index: {}]
  %s2 = inlined_call_operand.hbm [shape: f32[2,3,16,16], index: 2, kind: output, shape index: {0}]
  %s3 = inlined_call_operand.vmem [shape: f32[2,3,1,1], index: 3, kind: output, shape index: {1}]
  %4 = xla_tuple %s2, %s3
  %s5 = sld [smem:[#allocation0]]
  $region65: #{tpu_custom_call.1} parent=0
    _
  %s7 = ssub.s32 1, %s5
  %s8 = scalar_select 0, %s7, %s5
  $region1: #{tpu_custom_call.1} parent=0
    #allocation2 [shape = 'u8[65536]{0}', space=vmem, size = 0x10000, scoped, tag = 'input window, operand 0']
    #allocation3 [shape = 's32[2]{0}', space=sflag, size = 0x8, scoped, tag = 'scoped memory for tpu_custom_call.1']
    #allocation4 [shape = 's32[2]{0}', space=sflag, size = 0x8, scoped, tag = 'scoped memory for tpu_custom_call.1']
    #allocation5 [shape = 'u8[16384]{0}', space=vmem, size = 0x4000, scoped, tag = 'input window, operand 1']
    #allocation6 [shape = 's32[2]{0}', space=sflag, size = 0x8, scoped, tag = 'scoped memory for tpu_custom_call.1']
    #allocation7 [shape = 'u8[16384]{0}', space=vmem, size = 0x4000, scoped, tag = 'output window, operand 0']
    %9 = vsyncpa [#allocation3], 0
    %s10 = scalar_lea.sflag [#allocation3], 1
    %11 = vsyncpa %s10, 0
    %12 = vsyncpa [#allocation6], 0
    %s13 = scalar_lea.sflag [#allocation6], 1
    %14 = vsyncpa %s13, 0
    %15 = vsyncpa [#allocation4], 0
    %s16 = scalar_lea.sflag [#allocation4], 1
    %17 = vsyncpa %s16, 0
    loop: start=0, step=1, limit=8
    $region2: #{tpu_custom_call.1} parent=1 // loop_pre_header
      _
    $region3: #{tpu_custom_call.1} parent=1 // loop_header
      %s19 = sphi 0, %s23
      %p20 = scmp.ge.s32.totalorder %s19, 8
      %s26 = sphi 0, %s38
      %s27 = sphi 0, %s34
      %s28 = sphi 0, %s26
      %s29 = sphi 0, %s27
      %s30 = sphi 0, %s28
      %s31 = sphi 0, %s29
      %s43 = sphi 0, %s45
      %s46 = sphi 0, %s43
      %s47 = sphi 0, %s46
      %s63 = sphi 0, %s47
      %s69 = sphi 0, %s71
      %s72 = sphi 0, %s69
      %s73 = sphi 0, %s72
      %s89 = sphi 0, %s73
      %s97 = sphi 0, %s99
      %s100 = sphi 0, %s97
      %s101 = sphi 0, %s100
      %s117 = sphi 0, %s101
      %s125 = sphi 0, %s127
      %s128 = sphi 0, %s125
      %s129 = sphi 0, %s128
      %s145 = sphi 0, %s129
    $region4: #{tpu_custom_call.1} parent=1 // loop_header_branch
      %22 = sbr.rel (%p20) target = $region8
    $region5: #{tpu_custom_call.1} parent=1 // loop_body
      %s24 = ssub.s32 %s19, 1
      %s25 = ssub.s32 %s19, 2
      %s32 = sadd.s32 1, %s27
      %p33 = scmp.ge.s32.totalorder %s32, 3
      %s34 = scalar_select %p33, 0, %s32
      %s35 = sadd.s32 1, %s26
      %s36 = scalar_select %p33, %s35, %s26
      %p37 = scmp.ge.s32.totalorder %s36, 2
      %s38 = scalar_select %p37, 0, %s36
      %s39 = ssub.s32 %s26, %s38
      %s40 = ssub.s32 %s27, %s34
      %s41 = sor.u32 %s39, %s40
      %p42 = scmp.eq.s32.totalorder %s41, 0
      %s44 = sadd.s32 %s43, 1
      %s45 = scalar_select %p42, %s43, %s44
      %p48 = pneg %p42
      %p49 = scmp.eq.s32.totalorder %s19, 5
      %p50 = por %p48, %p49
      %p51 = scmp.ne.s32.totalorder %s43, %s46
      %p52 = scmp.eq.s32.totalorder %s19, 0
      %p53 = por %p51, %p52
      %p54 = scmp.ne.s32.totalorder %s43, %s46
      %p55 = scmp.eq.s32.totalorder %s24, 5
      %p56 = por %p54, %p55
      %p57 = scmp.ne.s32.totalorder %s46, %s47
      %p58 = scmp.eq.s32.totalorder %s24, 0
      %p59 = por %p57, %p58
      %p60 = scmp.ne.s32.totalorder %s46, %s47
      %p61 = scmp.eq.s32.totalorder %s25, 5
      %p62 = por %p60, %p61
      %p64 = scmp.ne.s32.totalorder %s47, %s63
      %p65 = scmp.eq.s32.totalorder %s25, 0
      %p66 = por %p64, %p65
      %s67 = ssub.s32 %s26, %s38
      %p68 = scmp.eq.s32.totalorder %s67, 0
      %s70 = sadd.s32 %s69, 1
      %s71 = scalar_select %p68, %s69, %s70
      %p74 = pneg %p68
      %p75 = scmp.eq.s32.totalorder %s19, 5
      %p76 = por %p74, %p75
      %p77 = scmp.ne.s32.totalorder %s69, %s72
      %p78 = scmp.eq.s32.totalorder %s19, 0
      %p79 = por %p77, %p78
      %p80 = scmp.ne.s32.totalorder %s69, %s72
      %p81 = scmp.eq.s32.totalorder %s24, 5
      %p82 = por %p80, %p81
      %p83 = scmp.ne.s32.totalorder %s72, %s73
      %p84 = scmp.eq.s32.totalorder %s24, 0
      %p85 = por %p83, %p84
      %p86 = scmp.ne.s32.totalorder %s72, %s73
      %p87 = scmp.eq.s32.totalorder %s25, 5
      %p88 = por %p86, %p87
      %p90 = scmp.ne.s32.totalorder %s73, %s89
      %p91 = scmp.eq.s32.totalorder %s25, 0
      %p92 = por %p90, %p91
      %s93 = ssub.s32 %s26, %s38
      %s94 = ssub.s32 %s27, %s34
      %s95 = sor.u32 %s93, %s94
      %p96 = scmp.eq.s32.totalorder %s95, 0
      %s98 = sadd.s32 %s97, 1
      %s99 = scalar_select %p96, %s97, %s98
      %p102 = pneg %p96
      %p103 = scmp.eq.s32.totalorder %s19, 5
      %p104 = por %p102, %p103
      %p105 = scmp.ne.s32.totalorder %s97, %s100
      %p106 = scmp.eq.s32.totalorder %s19, 0
      %p107 = por %p105, %p106
      %p108 = scmp.ne.s32.totalorder %s97, %s100
      %p109 = scmp.eq.s32.totalorder %s24, 5
      %p110 = por %p108, %p109
      %p111 = scmp.ne.s32.totalorder %s100, %s101
      %p112 = scmp.eq.s32.totalorder %s24, 0
      %p113 = por %p111, %p112
      %p114 = scmp.ne.s32.totalorder %s100, %s101
      %p115 = scmp.eq.s32.totalorder %s25, 5
      %p116 = por %p114, %p115
      %p118 = scmp.ne.s32.totalorder %s101, %s117
      %p119 = scmp.eq.s32.totalorder %s25, 0
      %p120 = por %p118, %p119
      %s121 = ssub.s32 %s26, %s38
      %s122 = ssub.s32 %s27, %s34
      %s123 = sor.u32 %s121, %s122
      %p124 = scmp.eq.s32.totalorder %s123, 0
      %s126 = sadd.s32 %s125, 1
      %s127 = scalar_select %p124, %s125, %s126
      %p130 = pneg %p124
      %p131 = scmp.eq.s32.totalorder %s19, 5
      %p132 = por %p130, %p131
      %p133 = scmp.ne.s32.totalorder %s125, %s128
      %p134 = scmp.eq.s32.totalorder %s19, 0
      %p135 = por %p133, %p134
      %p136 = scmp.ne.s32.totalorder %s125, %s128
      %p137 = scmp.eq.s32.totalorder %s24, 5
      %p138 = por %p136, %p137
      %p139 = scmp.ne.s32.totalorder %s128, %s129
      %p140 = scmp.eq.s32.totalorder %s24, 0
      %p141 = por %p139, %p140
      %p142 = scmp.ne.s32.totalorder %s128, %s129
      %p143 = scmp.eq.s32.totalorder %s25, 5
      %p144 = por %p142, %p143
      %p146 = scmp.ne.s32.totalorder %s129, %s145
      %p147 = scmp.eq.s32.totalorder %s25, 0
      %p148 = por %p146, %p147
      %p149 = scmp.le.s32.totalorder 1, %s19
      %p150 = scmp.lt.s32.totalorder %s19, 7
      %p151 = pnand %p149, %p150
      %p152 = pneg %p151
      // Predicated region
      $region9: #{tpu_custom_call.1} parent=5 // pred_check
        _
      $region10: #{tpu_custom_call.1} parent=5 // pred_check_branch
        %154 = sbr.rel (%p151) target = $region12
      $region11: #{tpu_custom_call.1} parent=5 // pred_region
        %s155 = ssub.s32 %s19, 1
      $region12: #{tpu_custom_call.1} parent=5 // pred_fallthru
        _
      %p156 = scmp.lt.s32.totalorder %s19, 6
      // Predicated region
      $region13: #{tpu_custom_call.1} parent=5 // pred_check
        %p157 = pneg %p156
      $region14: #{tpu_custom_call.1} parent=5 // pred_check_branch
        %159 = sbr.rel (%p157) target = $region16
      $region15: #{tpu_custom_call.1} parent=5 // pred_region
        // Predicated region
        $region17: #{tpu_custom_call.1} parent=15 // pred_check
          %p160 = pneg %p53
        $region18: #{tpu_custom_call.1} parent=15 // pred_check_branch
          %162 = sbr.rel (%p160) target = $region20
        $region19: #{tpu_custom_call.1} parent=15 // pred_region
          %s163 = sand.u32 %s43, 1
          %s164 = scalar_lea.sflag [#allocation3], %s163
          %s165 = sand.u32 %s43, 1
          %s166 = smul.addr %s165, 64
          %s167 = scalar_lea.vmem [#allocation2], %s166
          %s169 = ssub.s32 1024, 1024
          %170 = vsyncadd %s164, %s169
          %s171 = smul.addr %s27, 8
          %s172 = smul.addr %s26, 24
          %s173 = sadd.s32 %s171, %s172
          %s174 = smul.addr %s173, 128
          %s175 = scalar_lea.hbm %s0, %s174
          %s176 = sshll.u32 %s167, 4
          %s177 = int_to_ptr.vmem [resolvable:$true] %s176
          %182 = dma.hbm_to_vmem [thread:$0]  %s175, 1024, %s177, %s164, 128, 128, 8
        $region20: #{tpu_custom_call.1} parent=15 // pred_fallthru
          _
        // Predicated region
        $region21: #{tpu_custom_call.1} parent=15 // pred_check
          %p183 = pneg %p79
        $region22: #{tpu_custom_call.1} parent=15 // pred_check_branch
          %185 = sbr.rel (%p183) target = $region24
        $region23: #{tpu_custom_call.1} parent=15 // pred_region
          %s186 = sand.u32 %s69, 1
          %s187 = scalar_lea.sflag [#allocation6], %s186
          %s188 = sand.u32 %s69, 1
          %s189 = smul.addr %s188, 16
          %s190 = scalar_lea.vmem [#allocation5], %s189
          %s192 = ssub.s32 256, 256
          %193 = vsyncadd %s187, %s192
          %s194 = smul.addr %s26, 2
          %s195 = smul.addr %s194, 128
          %s196 = scalar_lea.hbm %s1, %s195
          %s197 = sshll.u32 %s190, 4
          %s198 = int_to_ptr.vmem [resolvable:$true] %s197
          %203 = dma.hbm_to_vmem [thread:$0]  %s196, 256, %s198, %s187, 128, 128, 8
        $region24: #{tpu_custom_call.1} parent=15 // pred_fallthru
          _
      $region16: #{tpu_custom_call.1} parent=5 // pred_fallthru
        _
      %p204 = scmp.le.s32.totalorder 1, %s19
      %p205 = scmp.lt.s32.totalorder %s19, 7
      %p206 = pnand %p204, %p205
      %p207 = pneg %p206
      // Predicated region
      $region25: #{tpu_custom_call.1} parent=5 // pred_check
        _
      $region26: #{tpu_custom_call.1} parent=5 // pred_check_branch
        %209 = sbr.rel (%p206) target = $region28
      $region27: #{tpu_custom_call.1} parent=5 // pred_region
        %s210 = ssub.s32 %s19, 1
        %s211 = sand.u32 %s46, 1
        %s212 = scalar_lea.sflag [#allocation3], %s211
        %s213 = sand.u32 %s46, 1
        %s214 = smul.addr %s213, 64
        %s215 = scalar_lea.vmem [#allocation2], %s214
        // Predicated region
        $region29: #{tpu_custom_call.1} parent=27 // pred_check
          %p216 = pneg %p59
        $region30: #{tpu_custom_call.1} parent=27 // pred_check_branch
          %218 = sbr.rel (%p216) target = $region32
        $region31: #{tpu_custom_call.1} parent=27 // pred_region
          %219 = dma.done %s212, 1024
        $region32: #{tpu_custom_call.1} parent=27 // pred_fallthru
          _
        %s220 = sand.u32 %s72, 1
        %s221 = scalar_lea.sflag [#allocation6], %s220
        %s222 = sand.u32 %s72, 1
        %s223 = smul.addr %s222, 16
        %s224 = scalar_lea.vmem [#allocation5], %s223
        // Predicated region
        $region33: #{tpu_custom_call.1} parent=27 // pred_check
          %p225 = pneg %p85
        $region34: #{tpu_custom_call.1} parent=27 // pred_check_branch
          %227 = sbr.rel (%p225) target = $region36
        $region35: #{tpu_custom_call.1} parent=27 // pred_region
          %228 = dma.done %s221, 256
        $region36: #{tpu_custom_call.1} parent=27 // pred_fallthru
          _
        %s229 = sand.u32 %s46, 1
        %s230 = scalar_lea.sflag [#allocation3], %s229
        %s231 = sand.u32 %s46, 1
        %s232 = smul.addr %s231, 64
        %s233 = scalar_lea.vmem [#allocation2], %s232
        %p234 = pneg %p59
        %p235 = pneg %p56
        %s236 = sand.u32 %s72, 1
        %s237 = scalar_lea.sflag [#allocation6], %s236
        %s238 = sand.u32 %s72, 1
        %s239 = smul.addr %s238, 16
        %s240 = scalar_lea.vmem [#allocation5], %s239
        %p241 = pneg %p85
        %p242 = pneg %p82
        %p243 = pneg %p113
        %p244 = pneg %p110
        %s245 = sand.u32 %s100, 1
        %s246 = scalar_lea.sflag [#allocation4], %s245
        %s247 = sand.u32 %s100, 1
        %s248 = smul.addr %s247, 16
        %s249 = scalar_lea.vmem [#allocation7], %s248
        %p250 = pneg %p141
        %p251 = pneg %p138
        %p252 = scmp.lt.s32.totalorder %s28, 1
        %s253 = scalar_select %p252, %s28, 1
        %p254 = scmp.lt.s32.totalorder %s29, 2
        %s255 = scalar_select %p254, %s29, 2
        %s256 = smul.addr %s253, 3
        %s257 = sadd.s32 %s255, %s256
        %s258 = scalar_lea.vmem %s3, %s257
        %p259 = scmp.lt.s32.totalorder %s28, 1
        %s260 = scalar_select %p259, %s28, 1
        %p261 = scmp.lt.s32.totalorder %s29, 2
        %s262 = scalar_select %p261, %s29, 2
        %s263 = smul.addr %s260, 3
        %s264 = sadd.s32 %s262, %s263
        %s265 = scalar_lea.vmem %s3, %s264
        %p266 = scmp.eq.s32.totalorder %s29, 0
        // Predicated region
        $region37: #{tpu_custom_call.1} parent=27 // pred_check
          %p267 = pneg %p266
        $region38: #{tpu_custom_call.1} parent=27 // pred_check_branch
          %269 = sbr.rel (%p267) target = $region40
        $region39: #{tpu_custom_call.1} parent=27 // pred_region
          %vm270 = vcmask 130048
          %271 = vst.msk [vmem:[%s249] sm:$0xff] %vm270, 1.0
          %272 = vst.msk [vmem:[%s249 + $0x8] sm:$0xff] %vm270, 1.0
          %vm273 = vcmask 0
          %274 = vst.msk [vmem:[%s265] sm:$0x1] %vm273, 0.0
        $region40: #{tpu_custom_call.1} parent=27 // pred_fallthru
          _
        %p275 = scmp.gt.s32.totalorder %s29, 0
        // Predicated region
        $region41: #{tpu_custom_call.1} parent=27 // pred_check
          %p276 = pneg %p275
        $region42: #{tpu_custom_call.1} parent=27 // pred_check_branch
          %278 = sbr.rel (%p276) target = $region44
        $region43: #{tpu_custom_call.1} parent=27 // pred_region
          %v279 = vld [vmem:[%s215] sm:$0xff]
          %v280 = vld [vmem:[%s215 + $0x8] sm:$0xff]
          %v281 = vld [vmem:[%s215 + $0x10] sm:$0xff]
          %v282 = vld [vmem:[%s215 + $0x18] sm:$0xff]
          %v283 = vld [vmem:[%s215 + $0x20] sm:$0xff]
          %v284 = vld [vmem:[%s215 + $0x28] sm:$0xff]
          %v285 = vld [vmem:[%s215 + $0x30] sm:$0xff]
          %v286 = vld [vmem:[%s215 + $0x38] sm:$0xff]
          %vm287 = vcmask 130048
          %v288 = vsel %vm287, %v279, -inf
          %v289 = vsel %vm287, %v281, -inf
          %v290 = vsel %vm287, %v283, -inf
          %v291 = vmax.f32 %v288, %v290
          %v292 = vsel %vm287, %v285, -inf
          %v293 = vmax.f32 %v289, %v292
          %v294 = vmax.f32 %v291, %v293
          %v295 = vsel %vm287, %v280, -inf
          %v296 = vsel %vm287, %v282, -inf
          %v297 = vsel %vm287, %v284, -inf
          %v298 = vmax.f32 %v295, %v297
          %v299 = vsel %vm287, %v286, -inf
          %v300 = vmax.f32 %v296, %v299
          %v301 = vmax.f32 %v298, %v300
          %v302 = vxor.u32 %v294, 2147483648
          %v303 = vxor.u32 %v301, 2147483648
          %v304 = vmul.f32 %v302, 1.442695
          %v305 = vpow.pop %v304
          %v306 = vmul.f32 %v303, 1.442695
          %v307 = vpow.pop %v306
          %v308 = vadd.f32 %v305, 1.0
          %v309 = vadd.f32 %v307, 1.0
          %v310 = vrcp.pop %v308
          %v311 = vmul.f32 1.0, %v310
          %v312 = vrcp.pop %v309
          %v313 = vmul.f32 1.0, %v312
          %v314 = vld [vmem:[%s224] sm:$0xff]
          %v315 = vld [vmem:[%s224 + $0x8] sm:$0xff]
          %v316 = vmul.f32 %v311, %v314
          %v317 = vmul.f32 %v313, %v315
          %v318 = vlaneseq
          %v319 = vand.u32 %v318, 127
          %vm320 = vcmask 1047680
          %321 = vrot.lane.b32.xlu0 %v316, 16
          %v322 = vpop.permute.xlu0 %321
          %v323 = vsel %vm320, %v322, %v316
          %324 = vrot.lane.b32.xlu0 %v317, 16
          %v325 = vpop.permute.xlu0 %324
          %v326 = vsel %vm320, %v325, %v317
          %327 = vrot.lane.b32.xlu0 %v323, 16
          %v328 = vpop.permute.xlu0 %327
          %329 = vrot.lane.b32.xlu0 %v326, 16
          %v330 = vpop.permute.xlu0 %329
          %v331 = vsel %vm320, %v328, %v316
          %v332 = vsel %vm320, %v330, %v317
          %vm333 = vcmp.lt.s32.totalorder %v319, 15
          %336 = vrot.lane.b32.xlu0 %v331, 127
          %v337 = vpop.permute.xlu0 %336
          %338 = vrot.lane.b32.xlu0 %v332, 127
          %v339 = vpop.permute.xlu0 %338
          %v342 = vsel %vm333, %v337, 0.0
          %v343 = vsel %vm333, %v339, 0.0
          %v344 = vmul.f32 %v342, 0.60653067
          %v345 = vmul.f32 %v343, 0.60653067
          %v346 = vadd.f32 %v316, %v344
          %v347 = vadd.f32 %v317, %v345
          %vm348 = vcmp.ge.s32.totalorder %v319, 1
          %349 = vrot.lane.b32.xlu0 %v331, 113
          %v350 = vpop.permute.xlu0 %349
          %351 = vrot.lane.b32.xlu0 %v332, 113
          %v352 = vpop.permute.xlu0 %351
          %v355 = vsel %vm348, %v350, 0.0
          %v356 = vsel %vm348, %v352, 0.0
          %v357 = vmul.f32 %v355, 0.60653067
          %v358 = vmul.f32 %v356, 0.60653067
          %v359 = vadd.f32 %v346, %v357
          %v360 = vadd.f32 %v347, %v358
          %vm361 = vcmp.lt.s32.totalorder %v319, 14
          %362 = vrot.lane.b32.xlu0 %v331, 126
          %v363 = vpop.permute.xlu0 %362
          %364 = vrot.lane.b32.xlu0 %v332, 126
          %v365 = vpop.permute.xlu0 %364
          %v368 = vsel %vm361, %v363, 0.0
          %v369 = vsel %vm361, %v365, 0.0
          %v370 = vmul.f32 %v368, 0.13533528
          %v371 = vmul.f32 %v369, 0.13533528
          %v372 = vadd.f32 %v359, %v370
          %v373 = vadd.f32 %v360, %v371
          %vm374 = vcmp.ge.s32.totalorder %v319, 2
          %375 = vrot.lane.b32.xlu0 %v331, 114
          %v376 = vpop.permute.xlu0 %375
          %377 = vrot.lane.b32.xlu0 %v332, 114
          %v378 = vpop.permute.xlu0 %377
          %v381 = vsel %vm374, %v376, 0.0
          %v382 = vsel %vm374, %v378, 0.0
          %v383 = vmul.f32 %v381, 0.13533528
          %v384 = vmul.f32 %v382, 0.13533528
          %v385 = vadd.f32 %v372, %v383
          %v386 = vadd.f32 %v373, %v384
          %v387 = vlaneseq
          %v388 = vshrl.u32 %v387, 7
          %v389 = vadd.s32 %v388, 8
          %v390 = vmul.f32 %v385, 0.15915494
          %v391 = vmul.f32 %v386, 0.15915494
          %v392 = vrot.slane %v385, 1
          %v393 = vrot.slane %v386, 1
          %vm394 = vcmp.lt.s32.totalorder %v388, 7
          %v395 = vsel %vm394, %v392, %v393
          %v396 = vsel %vm394, %v393, %v392
          %vm397 = vcmp.lt.s32.totalorder %v388, 15
          %vm398 = vcmp.lt.s32.totalorder %v389, 15
          %v399 = vsel %vm397, %v395, 0.0
          %v400 = vsel %vm398, %v396, 0.0
          %v401 = vmul.f32 %v399, 0.09653235
          %v402 = vmul.f32 %v400, 0.09653235
          %v403 = vadd.f32 %v390, %v401
          %v404 = vadd.f32 %v391, %v402
          %v405 = vrot.slane %v385, 7
          %v406 = vrot.slane %v386, 7
          %vm407 = vcmp.lt.s32.totalorder %v388, 1
          %v408 = vsel %vm407, %v405, %v406
          %v409 = vsel %vm407, %v406, %v405
          %vm410 = vcmp.ge.s32.totalorder %v388, 1
          %vm411 = vcmp.ge.s32.totalorder %v389, 1
          %v412 = vsel %vm410, %v409, 0.0
          %v413 = vsel %vm411, %v408, 0.0
          %v414 = vmul.f32 %v412, 0.09653235
          %v415 = vmul.f32 %v413, 0.09653235
          %v416 = vadd.f32 %v403, %v414
          %v417 = vadd.f32 %v404, %v415
          %v418 = vrot.slane %v385, 2
          %v419 = vrot.slane %v386, 2
          %vm420 = vcmp.lt.s32.totalorder %v388, 6
          %v421 = vsel %vm420, %v418, %v419
          %v422 = vsel %vm420, %v419, %v418
          %vm423 = vcmp.lt.s32.totalorder %v388, 14
          %vm424 = vcmp.lt.s32.totalorder %v389, 14
          %v425 = vsel %vm423, %v421, 0.0
          %v426 = vsel %vm424, %v422, 0.0
          %v427 = vmul.f32 %v425, 0.02153928
          %v428 = vmul.f32 %v426, 0.02153928
          %v429 = vadd.f32 %v416, %v427
          %v430 = vadd.f32 %v417, %v428
          %v431 = vrot.slane %v385, 6
          %v432 = vrot.slane %v386, 6
          %vm433 = vcmp.lt.s32.totalorder %v388, 2
          %v434 = vsel %vm433, %v431, %v432
          %v435 = vsel %vm433, %v432, %v431
          %vm436 = vcmp.ge.s32.totalorder %v388, 2
          %vm437 = vcmp.ge.s32.totalorder %v389, 2
          %v438 = vsel %vm436, %v435, 0.0
          %v439 = vsel %vm437, %v434, 0.0
          %v440 = vmul.f32 %v438, 0.02153928
          %v441 = vmul.f32 %v439, 0.02153928
          %v442 = vadd.f32 %v429, %v440
          %v443 = vadd.f32 %v430, %v441
          %vm444 = vcmp.gt.f32.partialorder %v442, 0.05
          %vm445 = vcmp.gt.f32.partialorder %v443, 0.05
          %v446 = vsel %vm444, 1.0, 0.0
          %v447 = vsel %vm445, 1.0, 0.0
          %448 = vst.msk [vmem:[%s249] sm:$0xff] %vm287, %v446
          %449 = vst.msk [vmem:[%s249 + $0x8] sm:$0xff] %vm287, %v447
          %v450 = vsel %vm287, %v446, 0.0
          %v451 = vsel %vm287, %v447, 0.0
          %v452 = vadd.f32 %v450, %v451
          %453 = vadd.xlane.f32.xlu0 %v452
          %v454 = vpop.xlane.xlu0 %453
          %v455 = vrot.slane %v454, 4
          %v456 = vadd.f32 %v454, %v455
          %v457 = vrot.slane %v456, 2
          %v458 = vadd.f32 %v456, %v457
          %v459 = vrot.slane %v458, 1
          %v460 = vadd.f32 %v458, %v459
          %s461 = vtos %v460
          %v462 = vstv %s461
          %vm463 = vcmask 0
          %464 = vst.msk [vmem:[%s265] sm:$0x1] %vm463, %v462
        $region44: #{tpu_custom_call.1} parent=27 // pred_fallthru
          _
        %s465 = sand.u32 %s100, 1
        %s466 = scalar_lea.sflag [#allocation4], %s465
        %s467 = sand.u32 %s100, 1
        %s468 = smul.addr %s467, 16
        %s469 = scalar_lea.vmem [#allocation7], %s468
        %p470 = scmp.lt.s32.totalorder %s28, 1
        %s471 = scalar_select %p470, %s28, 1
        %p472 = scmp.lt.s32.totalorder %s29, 2
        %s473 = scalar_select %p472, %s29, 2
        %s474 = smul.addr %s471, 3
        %s475 = sadd.s32 %s473, %s474
        %s476 = scalar_lea.vmem %s3, %s475
        // Predicated region
        $region45: #{tpu_custom_call.1} parent=27 // pred_check
          %p477 = pneg %p110
        $region46: #{tpu_custom_call.1} parent=27 // pred_check_branch
          %479 = sbr.rel (%p477) target = $region48
        $region47: #{tpu_custom_call.1} parent=27 // pred_region
          %s481 = ssub.s32 256, 256
          %482 = vsyncadd %s466, %s481
          %s483 = smul.addr %s29, 2
          %s484 = smul.addr %s28, 6
          %s485 = sadd.s32 %s483, %s484
          %s486 = smul.addr %s485, 128
          %s487 = scalar_lea.hbm %s2, %s486
          %s488 = sshll.u32 %s469, 4
          %s489 = int_to_ptr.vmem [resolvable:$true] %s488
          %494 = dma.vmem_to_hbm [thread:$0]  %s489, 256, %s487, %s466, 128, 128, 8
        $region48: #{tpu_custom_call.1} parent=27 // pred_fallthru
          _
        // Predicated region
        $region49: #{tpu_custom_call.1} parent=27 // pred_check
          %p495 = pneg %p138
        $region50: #{tpu_custom_call.1} parent=27 // pred_check_branch
          %497 = sbr.rel (%p495) target = $region52
        $region51: #{tpu_custom_call.1} parent=27 // pred_region
          _
        $region52: #{tpu_custom_call.1} parent=27 // pred_fallthru
          _
      $region28: #{tpu_custom_call.1} parent=5 // pred_fallthru
        _
      %p498 = scmp.le.s32.totalorder 2, %s19
      // Predicated region
      $region53: #{tpu_custom_call.1} parent=5 // pred_check
        %p499 = pneg %p498
      $region54: #{tpu_custom_call.1} parent=5 // pred_check_branch
        %501 = sbr.rel (%p499) target = $region56
      $region55: #{tpu_custom_call.1} parent=5 // pred_region
        %s502 = ssub.s32 %s19, 2
        // Predicated region
        $region57: #{tpu_custom_call.1} parent=55 // pred_check
          %p503 = pneg %p116
        $region58: #{tpu_custom_call.1} parent=55 // pred_check_branch
          %505 = sbr.rel (%p503) target = $region60
        $region59: #{tpu_custom_call.1} parent=55 // pred_region
          %s506 = sand.u32 %s101, 1
          %s507 = scalar_lea.sflag [#allocation4], %s506
          %s508 = sand.u32 %s101, 1
          %s509 = smul.addr %s508, 16
          %s510 = scalar_lea.vmem [#allocation7], %s509
          %511 = dma.done %s507, 256
        $region60: #{tpu_custom_call.1} parent=55 // pred_fallthru
          _
        // Predicated region
        $region61: #{tpu_custom_call.1} parent=55 // pred_check
          %p512 = pneg %p144
        $region62: #{tpu_custom_call.1} parent=55 // pred_check_branch
          %514 = sbr.rel (%p512) target = $region64
        $region63: #{tpu_custom_call.1} parent=55 // pred_region
          %p515 = scmp.lt.s32.totalorder %s30, 1
          %s516 = scalar_select %p515, %s30, 1
          %p517 = scmp.lt.s32.totalorder %s31, 2
          %s518 = scalar_select %p517, %s31, 2
          %s519 = smul.addr %s516, 3
          %s520 = sadd.s32 %s518, %s519
          %s521 = scalar_lea.vmem %s3, %s520
        $region64: #{tpu_custom_call.1} parent=55 // pred_fallthru
          _
      $region56: #{tpu_custom_call.1} parent=5 // pred_fallthru
        _
    $region6: #{tpu_custom_call.1} parent=1 // loop_footer
      %s23 = sadd.s32 1, %s19
    $region7: #{tpu_custom_call.1} parent=1 // loop_footer_branch
      %18 = sbr.rel target = $region3
    $region8: #{tpu_custom_call.1} parent=1 // loop_exit
      _
    %522 = vsyncpa [#allocation3], 1
    %s523 = scalar_lea.sflag [#allocation3], 1
    %524 = vsyncpa %s523, 1
    %525 = vsyncpa [#allocation6], 1
    %s526 = scalar_lea.sflag [#allocation6], 1
    %527 = vsyncpa %s526, 1
    %528 = vsyncpa [#allocation4], 1
    %s529 = scalar_lea.sflag [#allocation4], 1
    %530 = vsyncpa %s529, 1

</llo_original>
